<compile_context>
chip_gen: v7x
topology: tpu7x:2x2x1
jax: 0.10.0
libtpu: 0.0.40
codegen_flags: <defaults>
</compile_context>

<pallas_src>
import functools

import jax
import jax.numpy as jnp
import numpy as np
from jax.experimental import pallas as pl
from jax.experimental.pallas import tpu as pltpu


def preprocess_kernel(x_ref, noise_ref, y_ref, sldj_ref, *, a, b, c, const):
    """Dequantize + logit transform + per-batch log-det-Jacobian sum.

    x_ref     : VMEM (Bt, Dt) f32 input image tile (flattened)
    noise_ref : VMEM (Bt, Dt) f32 uniform noise tile in [0, 1)
    y_ref     : VMEM (Bt, Dt) f32 output logits tile
    sldj_ref  : VMEM (Bt, 1)  f32 per-row log-det accumulator (resident over D axis)
    """
    d_idx = pl.program_id(1)

    x = x_ref[...]
    u = noise_ref[...]

    # p = ((x*255 + u)/256 * 2 - 1) * bound / 2 + 1/2  ==  x*a + u*b + c
    p = x * a + u * b + c

    lp = jnp.log(p)
    l1p = jnp.log1p(-p)

    # y = logit(p)
    y_ref[...] = lp - l1p

    # ldj = softplus(y) + softplus(-y) - const == -(log(p) + log(1-p)) - const
    tile_sum = jnp.sum(-(lp + l1p) - const, axis=-1, keepdims=True)

    @pl.when(d_idx == 0)
    def _():
        sldj_ref[...] = jnp.zeros_like(sldj_ref)

    sldj_ref[...] += tile_sum


def _pick_tile(total, align, target):
    """Largest divisor of `total` that is a multiple of `align` and <= target.

    Falls back to the full extent when `total` is not align-divisible
    (full-extent blocks are always legal)."""
    if total % align != 0:
        return total
    tile = min(total, max(align, (target // align) * align))
    while total % tile != 0:
        tile -= align
    return tile


@functools.partial(jax.jit, static_argnames=("bound",))
def preprocess(x, noise, bound=0.9):
    """x: [B, C, H, W] float32 image in [0, 1]; noise: uniform [0,1) same shape."""
    B = x.shape[0]
    D = int(np.prod(x.shape[1:]))
    x_flat = x.reshape(B, D).astype(jnp.float32)
    noise_flat = noise.reshape(B, D).astype(jnp.float32)

    # Trace-time (Python/numpy) constants -- no SMEM scalar traffic.
    a = 255.0 * bound / 256.0
    b = bound / 256.0
    c = (1.0 - bound) / 2.0
    const = float(np.logaddexp(np.log(1.0 - bound) - np.log(bound), 0.0))

    # Tile sizes: ~2 MiB f32 per input block so 3 streams x 2 buffers stays
    # well inside v7x's 64 MiB VMEM while keeping lanes >= 512 wide.
    bt = _pick_tile(B, 8, 256)
    dt = _pick_tile(D, 128, 2048)
    grid = (pl.cdiv(B, bt), pl.cdiv(D, dt))

    kernel = functools.partial(preprocess_kernel, a=a, b=b, c=c, const=const)

    y_flat, sldj = pl.pallas_call(
        kernel,
        out_shape=(
            jax.ShapeDtypeStruct((B, D), jnp.float32),
            jax.ShapeDtypeStruct((B, 1), jnp.float32),
        ),
        grid=grid,
        in_specs=[
            pl.BlockSpec((bt, dt), lambda i, j: (i, j)),   # x tile
            pl.BlockSpec((bt, dt), lambda i, j: (i, j)),   # noise tile
        ],
        out_specs=(
            pl.BlockSpec((bt, dt), lambda i, j: (i, j)),   # y tile
            pl.BlockSpec((bt, 1), lambda i, j: (i, 0)),    # sldj accumulator
        ),
        compiler_params=pltpu.CompilerParams(
            dimension_semantics=("parallel", "arbitrary"),
            vmem_limit_bytes=32 * 1024 * 1024,
        ),
    )(x_flat, noise_flat)

    return y_flat.reshape(x.shape), sldj.reshape(B)


def preprocess_ref(x, noise, bound=0.9):
    """Pure-JAX reference mirroring the PyTorch forward (same noise)."""
    y = (x * 255.0 + noise) / 256.0
    y = (2.0 * y - 1.0) * bound
    y = (y + 1.0) / 2.0
    y = jnp.log(y) - jnp.log(1.0 - y)
    const = jax.nn.softplus(jnp.log(1.0 - bound) - jnp.log(bound))
    ldj = jax.nn.softplus(y) + jax.nn.softplus(-y) - const
    sldj = ldj.reshape(x.shape[0], -1).sum(-1)
    return y, sldj


if __name__ == "__main__":
    key = jax.random.PRNGKey(0)
    kx, kn = jax.random.split(key)

    B, C, H, W = 2, 4, 16, 16
    # image-like input in [0, 1]
    x = jax.random.uniform(kx, (B, C, H, W), dtype=jnp.float32)
    # torch.rand_like(x) equivalent, generated deterministically as glue
    noise = jax.random.uniform(kn, (B, C, H, W), dtype=jnp.float32)

    y, sldj = preprocess(x, noise, bound=0.9)
    y = jax.block_until_ready(y)
    sldj = jax.block_until_ready(sldj)

    y_ref, sldj_ref = preprocess_ref(x, noise, bound=0.9)
    np.testing.assert_allclose(np.asarray(y), np.asarray(y_ref), rtol=1e-5, atol=1e-5)
    np.testing.assert_allclose(np.asarray(sldj), np.asarray(sldj_ref), rtol=1e-5, atol=1e-3)

    print("KERNEL_OK")
</pallas_src>

<mosaic_0001>
module attributes {stable_mosaic.version = 11 : i64} {
  func.func @preprocess_kernel(%arg0: i32, %arg1: i32, %arg2: memref<2x1024xf32, #tpu.memory_space<vmem>>, %arg3: memref<2x1024xf32, #tpu.memory_space<vmem>>, %arg4: memref<2x1024xf32, #tpu.memory_space<vmem>>, %arg5: memref<2x1xf32, #tpu.memory_space<vmem>>) attributes {dimension_semantics = [#tpu.dimension_semantics<parallel>, #tpu.dimension_semantics<arbitrary>], iteration_bounds = array<i64: 1, 1>, scalar_prefetch = 0 : i64, scratch_operands = 0 : i64, tpu.core_type = #tpu.core_type<tc>, window_params = [{transform_indices = @transform_0, window_bounds = array<i64: 2, 1024>}, {transform_indices = @transform_1, window_bounds = array<i64: 2, 1024>}, {transform_indices = @transform_2, window_bounds = array<i64: 2, 1024>}, {transform_indices = @transform_3, window_bounds = array<i64: 2, 1>}]} {
    %c0 = arith.constant 0 : index
    %c0_0 = arith.constant 0 : index
    %0 = vector.load %arg2[%c0, %c0_0] : memref<2x1024xf32, #tpu.memory_space<vmem>>, vector<2x1024xf32>
    %c0_1 = arith.constant 0 : index
    %c0_2 = arith.constant 0 : index
    %1 = vector.load %arg3[%c0_1, %c0_2] : memref<2x1024xf32, #tpu.memory_space<vmem>>, vector<2x1024xf32>
    %cst = arith.constant 0.896484375 : f32
    %2 = vector.broadcast %cst : f32 to vector<2x1024xf32>
    %3 = arith.mulf %0, %2 : vector<2x1024xf32>
    %cst_3 = arith.constant 0.00351562491 : f32
    %4 = vector.broadcast %cst_3 : f32 to vector<2x1024xf32>
    %5 = arith.mulf %1, %4 : vector<2x1024xf32>
    %6 = arith.addf %3, %5 : vector<2x1024xf32>
    %cst_4 = arith.constant 5.000000e-02 : f32
    %7 = vector.broadcast %cst_4 : f32 to vector<2x1024xf32>
    %8 = arith.addf %6, %7 : vector<2x1024xf32>
    %9 = math.log %8 : vector<2x1024xf32>
    %cst_5 = arith.constant 0.000000e+00 : f32
    %10 = vector.broadcast %cst_5 : f32 to vector<2x1024xf32>
    %11 = arith.subf %10, %8 : vector<2x1024xf32>
    %12 = math.log1p %11 : vector<2x1024xf32>
    %13 = arith.subf %9, %12 : vector<2x1024xf32>
    %c0_6 = arith.constant 0 : index
    %c0_7 = arith.constant 0 : index
    %14 = vector.load %arg4[%c0_6, %c0_7] : memref<2x1024xf32, #tpu.memory_space<vmem>>, vector<2x1024xf32>
    tpu.vector_store %arg4[%c0_6, %c0_7], %13 {strides = array<i32>} : memref<2x1024xf32, #tpu.memory_space<vmem>>, vector<2x1024xf32>,
    %15 = arith.addf %9, %12 : vector<2x1024xf32>
    %cst_8 = arith.constant 0.000000e+00 : f32
    %16 = vector.broadcast %cst_8 : f32 to vector<2x1024xf32>
    %17 = arith.subf %16, %15 : vector<2x1024xf32>
    %cst_9 = arith.constant 0.105360515 : f32
    %18 = vector.broadcast %cst_9 : f32 to vector<2x1024xf32>
    %19 = arith.subf %17, %18 : vector<2x1024xf32>
    %cst_10 = arith.constant dense<0.000000e+00> : vector<2xf32>
    %20 = vector.multi_reduction <add>, %19, %cst_10 [1] : vector<2x1024xf32> to vector<2xf32>
    %21 = vector.shape_cast %20 : vector<2xf32> to vector<2x1xf32>
    %c0_i32 = arith.constant 0 : i32
    %22 = arith.cmpi eq, %arg1, %c0_i32 : i32
    %23 = arith.extui %22 : i1 to i32
    %c0_i32_11 = arith.constant 0 : i32
    %24 = arith.cmpi ne, %23, %c0_i32_11 : i32
    scf.if %24 {
      %cst_16 = arith.constant 0.000000e+00 : f32
      %28 = vector.broadcast %cst_16 : f32 to vector<2x1xf32>
      %c0_17 = arith.constant 0 : index
      %c0_18 = arith.constant 0 : index
      %29 = vector.load %arg5[%c0_17, %c0_18] : memref<2x1xf32, #tpu.memory_space<vmem>>, vector<2x1xf32>
      tpu.vector_store %arg5[%c0_17, %c0_18], %28 {strides = array<i32>} : memref<2x1xf32, #tpu.memory_space<vmem>>, vector<2x1xf32>,
    } else {
    }
    %c0_12 = arith.constant 0 : index
    %c0_13 = arith.constant 0 : index
    %25 = vector.load %arg5[%c0_12, %c0_13] : memref<2x1xf32, #tpu.memory_space<vmem>>, vector<2x1xf32>
    %26 = arith.addf %25, %21 : vector<2x1xf32>
    %c0_14 = arith.constant 0 : index
    %c0_15 = arith.constant 0 : index
    %27 = vector.load %arg5[%c0_14, %c0_15] : memref<2x1xf32, #tpu.memory_space<vmem>>, vector<2x1xf32>
    tpu.vector_store %arg5[%c0_14, %c0_15], %26 {strides = array<i32>} : memref<2x1xf32, #tpu.memory_space<vmem>>, vector<2x1xf32>,
    return
  }
  func.func @transform_0(%arg0: i32, %arg1: i32) -> (i32, i32) {
    %c0_i32 = arith.constant 0 : i32
    return %arg0, %arg1 : i32, i32
  }
  func.func @transform_1(%arg0: i32, %arg1: i32) -> (i32, i32) {
    %c0_i32 = arith.constant 0 : i32
    return %arg0, %arg1 : i32, i32
  }
  func.func @transform_2(%arg0: i32, %arg1: i32) -> (i32, i32) {
    %c0_i32 = arith.constant 0 : i32
    return %arg0, %arg1 : i32, i32
  }
  func.func @transform_3(%arg0: i32, %arg1: i32) -> (i32, i32) {
    %c0_i32 = arith.constant 0 : i32
    %c0_i32_0 = arith.constant 0 : i32
    return %arg0, %c0_i32 : i32, i32
  }
}

</mosaic_0001>

<llo_original>
// kernel: preprocess.1
$region0: #{preprocess.1}
  #allocation0 [shape = 'u32[]', space=smem, size = 0x4, offset = 0x4, fixed_abs, tag = 'smem constant byte address 0x4 - core index']
  #allocation1 [shape = 'u32[144,128]{1,0:T(1,128)}', space=vmem, size = 0x12000, scoped, tag = 'internal scratch']
  %s0 = inlined_call_operand.vmem [shape: f32[2,1024], index: 0, kind: input, shape index: {}]
  %s1 = inlined_call_operand.vmem [shape: f32[2,1024], index: 1, kind: input, shape index: {}]
  %s2 = inlined_call_operand.vmem [shape: f32[2,1024], index: 2, kind: output, shape index: {0}]
  %s3 = inlined_call_operand.vmem [shape: f32[2,1], index: 3, kind: output, shape index: {1}]
  %4 = xla_tuple %s2, %s3
  %s5 = sld [smem:[#allocation0]]
  $region30: #{preprocess.1} parent=0
    _
  %s7 = ssub.s32 1, %s5
  %s8 = scalar_select 0, %s7, %s5
  // Predicated region
  $region2: #{preprocess.1} parent=0 // pred_check
    _
  $region3: #{preprocess.1} parent=0 // pred_check_branch
    %10 = sbr.rel (0) target = $region5
  $region4: #{preprocess.1} parent=0 // pred_region
    _
  $region5: #{preprocess.1} parent=0 // pred_fallthru
    _
  // Predicated region
  $region6: #{preprocess.1} parent=0 // pred_check
    _
  $region7: #{preprocess.1} parent=0 // pred_check_branch
    %12 = sbr.rel (0) target = $region9
  $region8: #{preprocess.1} parent=0 // pred_region
    _
  $region9: #{preprocess.1} parent=0 // pred_fallthru
    _
  %v13 = vld [vmem:[%s0] sm:$0xff]
  %v14 = vld [vmem:[%s0 + $0x8] sm:$0xff]
  %v15 = vld [vmem:[%s1] sm:$0xff]
  %v16 = vld [vmem:[%s1 + $0x8] sm:$0xff]
  %v17 = vmul.f32 %v13, 0.8964844
  %v18 = vmul.f32 %v14, 0.8964844
  %v19 = vmul.f32 %v15, 0.003515625
  %v20 = vmul.f32 %v16, 0.003515625
  %v21 = vadd.f32 %v17, %v19
  %v22 = vadd.f32 %v18, %v20
  %v23 = vadd.f32 %v21, 0.05
  %v24 = vadd.f32 %v22, 0.05
  %v25 = vlog2.pop %v23
  %v26 = vmul.f32 %v25, 0.6931472
  %v27 = vlog2.pop %v24
  %v28 = vmul.f32 %v27, 0.6931472
  %v29 = vsub.f32 0.0, %v23
  %v30 = vsub.f32 0.0, %v24
  %v31 = vadd.f32 %v29, 1.0
  %v32 = vlog2.pop %v31
  %v33 = vmul.f32 %v32, 0.6931472
  %v34 = vmul.f32 -0.5, %v29
  %v35 = vadd.f32 %v34, 1.0
  %v36 = vmul.f32 %v35, %v29
  %v37 = vand.u32 2147483647, %v29
  %vm38 = vcmp.lt.f32.partialorder %v37, 0.0004427343
  %v39 = vsel %vm38, %v36, %v33
  %v40 = vadd.f32 %v30, 1.0
  %v41 = vlog2.pop %v40
  %v42 = vmul.f32 %v41, 0.6931472
  %v43 = vmul.f32 -0.5, %v30
  %v44 = vadd.f32 %v43, 1.0
  %v45 = vmul.f32 %v44, %v30
  %v46 = vand.u32 2147483647, %v30
  %vm47 = vcmp.lt.f32.partialorder %v46, 0.0004427343
  %v48 = vsel %vm47, %v45, %v42
  %v49 = vsub.f32 %v26, %v39
  %v50 = vsub.f32 %v28, %v48
  %51 = vst [vmem:[%s2] sm:$0xff] %v49
  %52 = vst [vmem:[%s2 + $0x8] sm:$0xff] %v50
  %v53 = vadd.f32 %v26, %v39
  %v54 = vadd.f32 %v28, %v48
  %v55 = vsub.f32 0.0, %v53
  %v56 = vsub.f32 0.0, %v54
  %v57 = vsub.f32 %v55, 0.105360515
  %v58 = vsub.f32 %v56, 0.105360515
  %v61 = vcombine.high %v57, %v57
  %v63 = vunpack.c.l.s4 1983009808
  %v64 = vunpack.c.0.s8 %v63
  %v65 = vlaneseq
  %v66 = vshrl.u32 %v65, 7
  %v67 = vsub.s32 %v64, %v66
  %v68 = vrot.slane %v57, %v67
  %v70 = vunpack.c.l.s4 1983009808
  %v71 = vunpack.c.0.s8 %v70
  %v72 = vlaneseq
  %v73 = vshrl.u32 %v72, 7
  %v74 = vsub.s32 %v71, %v73
  %v75 = vrot.slane %v61, %v74
  %v76 = vcombine.high %v68, %v68
  %v77 = vcombine.high %v75, %v75
  %v78 = vcombine.high %v58, %v58
  %v80 = vunpack.c.l.s4 1983009808
  %v81 = vunpack.c.0.s8 %v80
  %v82 = vlaneseq
  %v83 = vshrl.u32 %v82, 7
  %v84 = vsub.s32 %v81, %v83
  %v85 = vrot.slane %v58, %v84
  %v87 = vunpack.c.l.s4 1983009808
  %v88 = vunpack.c.0.s8 %v87
  %v89 = vlaneseq
  %v90 = vshrl.u32 %v89, 7
  %v91 = vsub.s32 %v88, %v90
  %v92 = vrot.slane %v78, %v91
  %v93 = vcombine.high %v85, %v85
  %v94 = vcombine.high %v92, %v92
  %vm103 = vcmask 1041408
  %v104 = vsel %vm103, %v68, 0.0
  %v105 = vsel %vm103, %v76, 0.0
  %v106 = vadd.f32 %v104, %v105
  %v107 = vsel %vm103, %v75, 0.0
  %v108 = vadd.f32 %v106, %v107
  %v109 = vsel %vm103, %v77, 0.0
  %v110 = vadd.f32 %v108, %v109
  %v111 = vsel %vm103, %v85, 0.0
  %v112 = vadd.f32 %v110, %v111
  %v113 = vsel %vm103, %v93, 0.0
  %v114 = vadd.f32 %v112, %v113
  %v115 = vsel %vm103, %v92, 0.0
  %v116 = vadd.f32 %v114, %v115
  %v117 = vsel %vm103, %v94, 0.0
  %v118 = vadd.f32 %v116, %v117
  %119 = vadd.xlane.f32.xlu0 %v118
  %v120 = vpop.xlane.xlu0 %119
  %p121 = scmp.eq.s32.totalorder 0, 0
  // Predicated region
  $region10: #{preprocess.1} parent=0 // pred_check
    %p122 = pneg %p121
  $region11: #{preprocess.1} parent=0 // pred_check_branch
    %124 = sbr.rel (%p122) target = $region13
  $region12: #{preprocess.1} parent=0 // pred_region
    %vm125 = vcmask 1024
    %126 = vst.msk [vmem:[%s3] sm:$0x3] %vm125, 0.0
  $region13: #{preprocess.1} parent=0 // pred_fallthru
    _
  %v127 = vld [vmem:[%s3] sm:$0x3]
  %v128 = vadd.f32 %v127, %v120
  %vm129 = vcmask 1024
  %130 = vst.msk [vmem:[%s3] sm:$0x3] %vm129, %v128
  // Predicated region
  $region14: #{preprocess.1} parent=0 // pred_check
    _
  $region15: #{preprocess.1} parent=0 // pred_check_branch
    %132 = sbr.rel (0) target = $region17
  $region16: #{preprocess.1} parent=0 // pred_region
    _
  $region17: #{preprocess.1} parent=0 // pred_fallthru
    _
  // Predicated region
  $region18: #{preprocess.1} parent=0 // pred_check
    _
  $region19: #{preprocess.1} parent=0 // pred_check_branch
    %134 = sbr.rel (0) target = $region21
  $region20: #{preprocess.1} parent=0 // pred_region
    _
  $region21: #{preprocess.1} parent=0 // pred_fallthru
    _
  // Predicated region
  $region22: #{preprocess.1} parent=0 // pred_check
    _
  $region23: #{preprocess.1} parent=0 // pred_check_branch
    %136 = sbr.rel (0) target = $region25
  $region24: #{preprocess.1} parent=0 // pred_region
    _
  $region25: #{preprocess.1} parent=0 // pred_fallthru
    _
  // Predicated region
  $region26: #{preprocess.1} parent=0 // pred_check
    _
  $region27: #{preprocess.1} parent=0 // pred_check_branch
    %138 = sbr.rel (0) target = $region29
  $region28: #{preprocess.1} parent=0 // pred_region
    _
  $region29: #{preprocess.1} parent=0 // pred_fallthru
    _

</llo_original>
